<compile_context>
chip_gen: v5e
topology: v5e:2x2
jax: 0.10.0
libtpu: 0.0.40
codegen_flags: <defaults>
</compile_context>

<pallas_src>
import functools

import jax
import jax.numpy as jnp
from jax.experimental import pallas as pl
from jax.experimental.pallas import tpu as pltpu


# ----------------------------------------------------------------------------
# Pallas kernel: tiled matmul with fused scale/bias (+ residual) (+ ReLU)
# ----------------------------------------------------------------------------
def _matmul_fused_kernel(*refs, relu, has_res):
    if has_res:
        a_ref, b_ref, s_ref, c_ref, r_ref, o_ref, acc_ref = refs
    else:
        a_ref, b_ref, s_ref, c_ref, o_ref, acc_ref = refs

    k = pl.program_id(2)

    @pl.when(k == 0)
    def _():
        acc_ref[...] = jnp.zeros_like(acc_ref)

    # bf16 x bf16 -> f32 accumulation on the MXU.
    acc_ref[...] += jnp.dot(a_ref[...], b_ref[...],
                            preferred_element_type=jnp.float32)

    @pl.when(k == pl.num_programs(2) - 1)
    def _():
        out = acc_ref[...] * s_ref[...] + c_ref[...]
        if has_res:
            out = out + r_ref[...].astype(jnp.float32)
        if relu:
            out = jnp.maximum(out, 0.0)
        o_ref[...] = out.astype(o_ref.dtype)


# ----------------------------------------------------------------------------
# Wrapper: padding + adaptive tiling
# ----------------------------------------------------------------------------
def _rup(x, m):
    return ((x + m - 1) // m) * m


def _cdiv(a, b):
    return -(-a // b)


def _pad_to(x, mult, axis):
    pad = (-x.shape[axis]) % mult
    if pad == 0:
        return x
    widths = [(0, 0)] * x.ndim
    widths[axis] = (0, pad)
    return jnp.pad(x, widths)


def _pick_tiles(M, K, N):
    # K tile: the largest of {512, 384, 256} that divides the 128-rounded K
    # (minimizes zero-padding of the reduction dim), else 128.
    Kp = _rup(K, 128)
    TK = 128
    for cand in (512, 384, 256):
        if Kp % cand == 0:
            TK = cand
            break
    TM = min(512, _rup(max(M, 8), 8))
    TN = min(512, _rup(max(N, 128), 128))
    # Megacore (v7x has 2 TCs): try to keep >= 2 blocks over the parallel axes.
    if _cdiv(M, TM) * _cdiv(N, TN) < 2:
        if TN >= 256:
            TN //= 2
        elif TM >= 16:
            TM = _rup(TM // 2, 8)
    return TM, TK, TN


@functools.partial(jax.jit, static_argnames=("relu", "out_dtype"))
def matmul_scale_bias(a, b, scale, bias, relu, residual=None,
                      out_dtype=jnp.bfloat16):
    """maybe_relu((a @ b) * scale + bias [+ residual]).

    a: (M, K) bf16, b: (K, N) bf16, scale/bias: (N,) f32 broadcast over rows,
    residual: optional (M, N) bf16 added before the ReLU.
    """
    M, K = a.shape
    _, N = b.shape
    TM, TK, TN = _pick_tiles(M, K, N)

    a_p = _pad_to(_pad_to(a, TM, 0), TK, 1)
    b_p = _pad_to(_pad_to(b, TK, 0), TN, 1)
    s_p = _pad_to(scale.reshape(1, N).astype(jnp.float32), TN, 1)
    c_p = _pad_to(bias.reshape(1, N).astype(jnp.float32), TN, 1)
    Mp, Kp = a_p.shape
    Np = b_p.shape[1]
    k_steps = Kp // TK

    # Deeper buffering on the weights stream when the K loop is long enough.
    if k_steps >= 3:
        b_spec = pl.BlockSpec((TK, TN), lambda i, j, k: (k, j),
                              pipeline_mode=pl.Buffered(3))
    else:
        b_spec = pl.BlockSpec((TK, TN), lambda i, j, k: (k, j))

    in_specs = [
        pl.BlockSpec((TM, TK), lambda i, j, k: (i, k)),
        b_spec,
        pl.BlockSpec((1, TN), lambda i, j, k: (0, j)),
        pl.BlockSpec((1, TN), lambda i, j, k: (0, j)),
    ]
    operands = [a_p, b_p, s_p, c_p]

    has_res = residual is not None
    if has_res:
        r_p = _pad_to(_pad_to(residual, TM, 0), TN, 1)
        in_specs.append(pl.BlockSpec((TM, TN), lambda i, j, k: (i, j)))
        operands.append(r_p)

    out = pl.pallas_call(
        functools.partial(_matmul_fused_kernel, relu=relu, has_res=has_res),
        out_shape=jax.ShapeDtypeStruct((Mp, Np), out_dtype),
        grid_spec=pltpu.PrefetchScalarGridSpec(
            num_scalar_prefetch=0,
            grid=(Mp // TM, Np // TN, k_steps),
            in_specs=in_specs,
            out_specs=pl.BlockSpec((TM, TN), lambda i, j, k: (i, j)),
            scratch_shapes=[pltpu.VMEM((TM, TN), jnp.float32)],
        ),
        compiler_params=pltpu.CompilerParams(
            dimension_semantics=("parallel", "parallel", "arbitrary"),
            vmem_limit_bytes=32 * 1024 * 1024),
    )(*operands)
    return out[:M, :N]


# ----------------------------------------------------------------------------
# Conv / pooling built on the kernel (im2col glue in plain JAX)
# ----------------------------------------------------------------------------
def _extract_patches(x, kh, kw, stride, pad):
    # x: (N, H, W, C) -> (N, Ho, Wo, kh*kw*C), K-ordering (i, j, c)
    # TODO(synk): 3x3 stride-1 convs could read shifted NHWC windows directly
    # inside the matmul kernel (tap-axis K grid) instead of materializing the
    # im2col tensor in HBM; kept as bf16 im2col glue here for robustness.
    N, H, W, C = x.shape
    xp = jnp.pad(x, ((0, 0), (pad, pad), (pad, pad), (0, 0)))
    Ho = (H + 2 * pad - kh) // stride + 1
    Wo = (W + 2 * pad - kw) // stride + 1
    cols = []
    for i in range(kh):
        for j in range(kw):
            cols.append(xp[:, i:i + stride * Ho:stride, j:j + stride * Wo:stride, :])
    return jnp.concatenate(cols, axis=-1), Ho, Wo


@functools.partial(jax.jit, static_argnames=("stride", "pad", "relu"))
def conv_bn(x, w, scale, bias, stride, pad, relu, residual=None):
    # x: (N,H,W,Cin) NHWC bf16 ; w: (kh,kw,Cin,Cout) bf16 ; folded-BN scale/bias (Cout,) f32.
    # residual (optional): (N,Ho,Wo,Cout) bf16, fused add+ReLU in the matmul epilogue.
    kh, kw, cin, cout = w.shape
    if kh == 1 and kw == 1 and pad == 0:
        if stride != 1:
            x = x[:, ::stride, ::stride, :]
        nb, Ho, Wo, _ = x.shape
        a = x.reshape(nb * Ho * Wo, cin)
    else:
        patches, Ho, Wo = _extract_patches(x, kh, kw, stride, pad)
        nb = x.shape[0]
        a = patches.reshape(nb * Ho * Wo, kh * kw * cin)
    b = w.reshape(kh * kw * cin, cout)
    r2d = None
    if residual is not None:
        r2d = residual.reshape(nb * Ho * Wo, cout)
    out = matmul_scale_bias(a, b, scale, bias, relu=relu, residual=r2d,
                            out_dtype=jnp.bfloat16)
    return out.reshape(nb, Ho, Wo, cout)


@jax.jit
def maxpool_3x3_s2(x):
    # TODO(synk): maxpool kept in plain-JAX glue (9-tap elementwise max on the
    # stem output; not a matmul hot path and XLA fuses the taps).
    N, H, W, C = x.shape
    k, stride, pad = 3, 2, 1
    xp = jnp.pad(x, ((0, 0), (pad, pad), (pad, pad), (0, 0)),
                 constant_values=-jnp.inf)
    Ho = (H + 2 * pad - k) // stride + 1
    Wo = (W + 2 * pad - k) // stride + 1
    out = jnp.full((N, Ho, Wo, C), -jnp.inf, x.dtype)
    for i in range(k):
        for j in range(k):
            out = jnp.maximum(
                out, xp[:, i:i + stride * Ho:stride, j:j + stride * Wo:stride, :])
    return out


# ----------------------------------------------------------------------------
# Deterministic synthetic parameters for ResNet-50 (eval-mode BN folded to affine)
# Frozen weights are pre-cast to bf16 once at init; BN affine stays f32.
# ----------------------------------------------------------------------------
class ParamGen:
    def __init__(self, seed=0):
        self.key = jax.random.PRNGKey(seed)

    def normal(self, shape, scale):
        self.key, sub = jax.random.split(self.key)
        return jax.random.normal(sub, shape, dtype=jnp.float32) * scale

    def conv(self, kh, kw, cin, cout):
        fan_in = float(kh * kw * cin)
        return self.normal((kh, kw, cin, cout), fan_in ** -0.5).astype(jnp.bfloat16)

    def bn(self, c):
        # eval-mode BN folded: y = scale * x + bias
        return 1.0 + self.normal((c,), 0.05), self.normal((c,), 0.05)


def init_resnet50_params(output_token_size, seed=0):
    pg = ParamGen(seed)
    params = {}
    s, b = pg.bn(64)
    params["stem"] = {"w": pg.conv(7, 7, 3, 64), "s": s, "b": b}

    cfg = [(3, 64, 1), (4, 128, 2), (6, 256, 2), (3, 512, 2)]
    layers = []
    cin = 64
    for nblocks, planes, layer_stride in cfg:
        layer = []
        for bi in range(nblocks):
            stride = layer_stride if bi == 0 else 1
            has_ds = (bi == 0)
            s1, b1 = pg.bn(planes)
            s2, b2 = pg.bn(planes)
            s3, b3 = pg.bn(planes * 4)
            blk = {
                "w1": pg.conv(1, 1, cin, planes), "s1": s1, "b1": b1,
                "w2": pg.conv(3, 3, planes, planes), "s2": s2, "b2": b2,
                "w3": pg.conv(1, 1, planes, planes * 4), "s3": s3, "b3": b3,
                "stride": stride, "has_ds": has_ds,
            }
            if has_ds:
                sd, bd = pg.bn(planes * 4)
                blk["wd"] = pg.conv(1, 1, cin, planes * 4)
                blk["sd"] = sd
                blk["bd"] = bd
            layer.append(blk)
            cin = planes * 4
        layers.append(layer)
    params["layers"] = layers
    params["fc"] = {
        "w": pg.normal((2048, output_token_size), 2048.0 ** -0.5).astype(jnp.bfloat16),
        "b": pg.normal((output_token_size,), 0.01),
    }
    return params


# ----------------------------------------------------------------------------
# Forward pass (== ImageEncoder.forward: frozen resnet50 with replaced fc)
# Note: backbone runs in bf16 with f32 accumulation (bf16-pass approximation of
# the f32 PyTorch reference).
# ----------------------------------------------------------------------------
def _bottleneck(x, p):
    identity = x
    out = conv_bn(x, p["w1"], p["s1"], p["b1"], stride=1, pad=0, relu=True)
    out = conv_bn(out, p["w2"], p["s2"], p["b2"], stride=p["stride"], pad=1, relu=True)
    if p["has_ds"]:
        identity = conv_bn(x, p["wd"], p["sd"], p["bd"],
                           stride=p["stride"], pad=0, relu=False)
    # conv3 with the residual add + ReLU fused into the matmul epilogue.
    out = conv_bn(out, p["w3"], p["s3"], p["b3"], stride=1, pad=0, relu=True,
                  residual=identity)
    return out


def image_encoder_forward(params, img_nchw):
    x = jnp.transpose(img_nchw.astype(jnp.float32), (0, 2, 3, 1))  # NCHW -> NHWC
    x = x.astype(jnp.bfloat16)
    x = conv_bn(x, params["stem"]["w"], params["stem"]["s"], params["stem"]["b"],
                stride=2, pad=3, relu=True)
    x = maxpool_3x3_s2(x)
    for layer in params["layers"]:
        for blk in layer:
            x = _bottleneck(x, blk)
    # TODO(synk): global average pool kept in plain-JAX glue (trivial reduction).
    feat = jnp.mean(x.astype(jnp.float32), axis=(1, 2))  # (N, 2048)
    ones = jnp.ones((params["fc"]["w"].shape[1],), jnp.float32)
    return matmul_scale_bias(feat.astype(jnp.bfloat16), params["fc"]["w"],
                             ones, params["fc"]["b"], relu=False,
                             residual=None, out_dtype=jnp.float32)


# ----------------------------------------------------------------------------
if __name__ == "__main__":
    output_token_size = 32
    params = init_resnet50_params(output_token_size, seed=0)

    key = jax.random.PRNGKey(0)
    img = jax.random.normal(key, (2, 3, 32, 32), dtype=jnp.float32)  # NCHW

    out = image_encoder_forward(params, img)
    out = jax.block_until_ready(out)
    assert out.shape == (2, output_token_size), out.shape
    assert out.dtype == jnp.float32
    assert bool(jnp.all(jnp.isfinite(out)))
    print("KERNEL_OK")
</pallas_src>

<mosaic_0001>
module attributes {stable_mosaic.version = 11 : i64} {
  func.func @_matmul_fused_kernel(%arg0: i32, %arg1: i32, %arg2: i32, %arg3: memref<256x256xbf16, #tpu.memory_space<vmem>>, %arg4: memref<256x128xbf16, #tpu.memory_space<vmem>>, %arg5: memref<1x128xf32, #tpu.memory_space<vmem>>, %arg6: memref<1x128xf32, #tpu.memory_space<vmem>>, %arg7: memref<256x128xbf16, #tpu.memory_space<vmem>>, %arg8: memref<256x128xf32, #tpu.memory_space<vmem>>) attributes {dimension_semantics = [#tpu.dimension_semantics<parallel>, #tpu.dimension_semantics<parallel>, #tpu.dimension_semantics<arbitrary>], iteration_bounds = array<i64: 2, 1, 1>, scalar_prefetch = 0 : i64, scratch_operands = 1 : i64, tpu.core_type = #tpu.core_type<tc>, window_params = [{transform_indices = @transform_0, window_bounds = array<i64: 256, 256>}, {transform_indices = @transform_1, window_bounds = array<i64: 256, 128>}, {transform_indices = @transform_2, window_bounds = array<i64: 1, 128>}, {transform_indices = @transform_3, window_bounds = array<i64: 1, 128>}, {transform_indices = @transform_4, window_bounds = array<i64: 256, 128>}]} {
    %c0_i32 = arith.constant 0 : i32
    %0 = arith.cmpi eq, %arg2, %c0_i32 : i32
    %1 = arith.extui %0 : i1 to i32
    %c0_i32_0 = arith.constant 0 : i32
    %2 = arith.cmpi ne, %1, %c0_i32_0 : i32
    scf.if %2 {
      %cst_10 = arith.constant 0.000000e+00 : f32
      %12 = vector.broadcast %cst_10 : f32 to vector<256x128xf32>
      %c0_11 = arith.constant 0 : index
      %c0_12 = arith.constant 0 : index
      %13 = vector.load %arg8[%c0_11, %c0_12] : memref<256x128xf32, #tpu.memory_space<vmem>>, vector<256x128xf32>
      tpu.vector_store %arg8[%c0_11, %c0_12], %12 {strides = array<i32>} : memref<256x128xf32, #tpu.memory_space<vmem>>, vector<256x128xf32>,
    } else {
    }
    %c0 = arith.constant 0 : index
    %c0_1 = arith.constant 0 : index
    %3 = vector.load %arg8[%c0, %c0_1] : memref<256x128xf32, #tpu.memory_space<vmem>>, vector<256x128xf32>
    %c0_2 = arith.constant 0 : index
    %c0_3 = arith.constant 0 : index
    %4 = vector.load %arg3[%c0_2, %c0_3] : memref<256x256xbf16, #tpu.memory_space<vmem>>, vector<256x256xbf16>
    %c0_4 = arith.constant 0 : index
    %c0_5 = arith.constant 0 : index
    %5 = vector.load %arg4[%c0_4, %c0_5] : memref<256x128xbf16, #tpu.memory_space<vmem>>, vector<256x128xbf16>
    %cst = arith.constant dense<0.000000e+00> : vector<256x128xf32>
    %6 = tpu.matmul %4, %5, %cst {dimension_numbers = #tpu.dot_dimension_numbers<[1], [0], [0], [1], [0, 0, 1, 1], [], []>} : vector<256x256xbf16>, vector<256x128xbf16>, vector<256x128xf32> -> vector<256x128xf32>
    %7 = arith.addf %3, %6 : vector<256x128xf32>
    %c0_6 = arith.constant 0 : index
    %c0_7 = arith.constant 0 : index
    %8 = vector.load %arg8[%c0_6, %c0_7] : memref<256x128xf32, #tpu.memory_space<vmem>>, vector<256x128xf32>
    tpu.vector_store %arg8[%c0_6, %c0_7], %7 {strides = array<i32>} : memref<256x128xf32, #tpu.memory_space<vmem>>, vector<256x128xf32>,
    %c0_i32_8 = arith.constant 0 : i32
    %9 = arith.cmpi eq, %arg2, %c0_i32_8 : i32
    %10 = arith.extui %9 : i1 to i32
    %c0_i32_9 = arith.constant 0 : i32
    %11 = arith.cmpi ne, %10, %c0_i32_9 : i32
    scf.if %11 {
      %c0_10 = arith.constant 0 : index
      %c0_11 = arith.constant 0 : index
      %12 = vector.load %arg8[%c0_10, %c0_11] : memref<256x128xf32, #tpu.memory_space<vmem>>, vector<256x128xf32>
      %c0_12 = arith.constant 0 : index
      %c0_13 = arith.constant 0 : index
      %13 = vector.load %arg5[%c0_12, %c0_13] : memref<1x128xf32, #tpu.memory_space<vmem>>, vector<1x128xf32>
      %14 = vector.broadcast %13 : vector<1x128xf32> to vector<256x128xf32>
      %15 = arith.mulf %12, %14 : vector<256x128xf32>
      %c0_14 = arith.constant 0 : index
      %c0_15 = arith.constant 0 : index
      %16 = vector.load %arg6[%c0_14, %c0_15] : memref<1x128xf32, #tpu.memory_space<vmem>>, vector<1x128xf32>
      %17 = vector.broadcast %16 : vector<1x128xf32> to vector<256x128xf32>
      %18 = arith.addf %15, %17 : vector<256x128xf32>
      %cst_16 = arith.constant 0.000000e+00 : f32
      %19 = vector.broadcast %cst_16 : f32 to vector<256x128xf32>
      %20 = arith.maximumf %18, %19 : vector<256x128xf32>
      %21 = arith.truncf %20 : vector<256x128xf32> to vector<256x128xbf16>
      %c0_17 = arith.constant 0 : index
      %c0_18 = arith.constant 0 : index
      %22 = vector.load %arg7[%c0_17, %c0_18] : memref<256x128xbf16, #tpu.memory_space<vmem>>, vector<256x128xbf16>
      tpu.vector_store %arg7[%c0_17, %c0_18], %21 {strides = array<i32>} : memref<256x128xbf16, #tpu.memory_space<vmem>>, vector<256x128xbf16>,
    } else {
    }
    return
  }
  func.func @transform_0(%arg0: i32, %arg1: i32, %arg2: i32) -> (i32, i32) {
    %c0_i32 = arith.constant 0 : i32
    return %arg0, %arg2 : i32, i32
  }
  func.func @transform_1(%arg0: i32, %arg1: i32, %arg2: i32) -> (i32, i32) {
    %c0_i32 = arith.constant 0 : i32
    return %arg2, %arg1 : i32, i32
  }
  func.func @transform_2(%arg0: i32, %arg1: i32, %arg2: i32) -> (i32, i32) {
    %c0_i32 = arith.constant 0 : i32
    %c0_i32_0 = arith.constant 0 : i32
    return %c0_i32, %arg1 : i32, i32
  }
  func.func @transform_3(%arg0: i32, %arg1: i32, %arg2: i32) -> (i32, i32) {
    %c0_i32 = arith.constant 0 : i32
    %c0_i32_0 = arith.constant 0 : i32
    return %c0_i32, %arg1 : i32, i32
  }
  func.func @transform_4(%arg0: i32, %arg1: i32, %arg2: i32) -> (i32, i32) {
    %c0_i32 = arith.constant 0 : i32
    return %arg0, %arg1 : i32, i32
  }
}

</mosaic_0001>

<llo_original>
// kernel: matmul_scale_bias.1
$region0: #{matmul_scale_bias.1}
  #allocation0 [shape = 'u32[]', space=smem, size = 0x4, offset = 0x4, fixed_abs, tag = 'smem constant byte address 0x4 - core index']
  #allocation1 [shape = 'u32[72,128]{1,0:T(1,128)}', space=vmem, size = 0x9000, scoped, tag = 'internal scratch']
  #allocation2 [shape = 'f32[256,128]{1,0:T(8,128)}', space=vmem, size = 0x20000, scoped, tag = 'scratch operand']
  %s0 = inlined_call_operand.vmem [shape: bf16[512,256], index: 0, kind: input, shape index: {}]
  %s1 = inlined_call_operand.vmem [shape: bf16[256,128], index: 1, kind: input, shape index: {}]
  %s2 = inlined_call_operand.vmem [shape: f32[1,128], index: 2, kind: input, shape index: {}]
  %s3 = inlined_call_operand.vmem [shape: f32[1,128], index: 3, kind: input, shape index: {}]
  %s4 = inlined_call_operand.vmem [shape: bf16[512,128], index: 4, kind: output, shape index: {}]
  %s5 = sld [smem:[#allocation0]]
  $region57: #{matmul_scale_bias.1} parent=0
    _
  %s7 = ssub.s32 1, %s5
  %s8 = scalar_select 0, %s7, %s5
  loop: start=0, step=1, limit=4
  $region2: #{matmul_scale_bias.1} parent=0 // loop_pre_header
    _
  $region3: #{matmul_scale_bias.1} parent=0 // loop_header
    %s10 = sphi 0, %s14
    %p11 = scmp.ge.s32.totalorder %s10, 4
    %s17 = sphi 0, %s36
    %s18 = sphi 0, %s32
    %s19 = sphi 0, %s28
    %s20 = sphi 0, %s17
    %s21 = sphi 0, %s18
    %s22 = sphi 0, %s19
    %s23 = sphi 0, %s20
    %s24 = sphi 0, %s21
    %s25 = sphi 0, %s22
    %s41 = sphi 0, %s43
    %s44 = sphi 0, %s41
    %s45 = sphi 0, %s44
    %s61 = sphi 0, %s45
    %s69 = sphi 0, %s71
    %s72 = sphi 0, %s69
    %s73 = sphi 0, %s72
    %s89 = sphi 0, %s73
    %s95 = sphi 0, %s97
    %s98 = sphi 0, %s95
    %s99 = sphi 0, %s98
    %s115 = sphi 0, %s99
    %s121 = sphi 0, %s123
    %s124 = sphi 0, %s121
    %s125 = sphi 0, %s124
    %s141 = sphi 0, %s125
    %s149 = sphi 0, %s151
    %s152 = sphi 0, %s149
    %s153 = sphi 0, %s152
    %s169 = sphi 0, %s153
  $region4: #{matmul_scale_bias.1} parent=0 // loop_header_branch
    %13 = sbr.rel (%p11) target = $region8
  $region5: #{matmul_scale_bias.1} parent=0 // loop_body
    %s15 = ssub.s32 %s10, 1
    %s16 = ssub.s32 %s10, 2
    %s26 = sadd.s32 1, %s19
    %p27 = scmp.ge.s32.totalorder %s26, 1
    %s28 = scalar_select %p27, 0, %s26
    %s29 = sadd.s32 1, %s18
    %s30 = scalar_select %p27, %s29, %s18
    %p31 = scmp.ge.s32.totalorder %s30, 1
    %s32 = scalar_select %p31, 0, %s30
    %s33 = sadd.s32 1, %s17
    %s34 = scalar_select %p31, %s33, %s17
    %p35 = scmp.ge.s32.totalorder %s34, 2
    %s36 = scalar_select %p35, 0, %s34
    %s37 = ssub.s32 %s17, %s36
    %s38 = ssub.s32 %s19, %s28
    %s39 = sor.u32 %s37, %s38
    %p40 = scmp.eq.s32.totalorder %s39, 0
    %s42 = sadd.s32 %s41, 1
    %s43 = scalar_select %p40, %s41, %s42
    %p46 = pneg %p40
    %p47 = scmp.eq.s32.totalorder %s10, 1
    %p48 = por %p46, %p47
    %p49 = scmp.ne.s32.totalorder %s41, %s44
    %p50 = scmp.eq.s32.totalorder %s10, 0
    %p51 = por %p49, %p50
    %p52 = scmp.ne.s32.totalorder %s41, %s44
    %p53 = scmp.eq.s32.totalorder %s15, 1
    %p54 = por %p52, %p53
    %p55 = scmp.ne.s32.totalorder %s44, %s45
    %p56 = scmp.eq.s32.totalorder %s15, 0
    %p57 = por %p55, %p56
    %p58 = scmp.ne.s32.totalorder %s44, %s45
    %p59 = scmp.eq.s32.totalorder %s16, 1
    %p60 = por %p58, %p59
    %p62 = scmp.ne.s32.totalorder %s45, %s61
    %p63 = scmp.eq.s32.totalorder %s16, 0
    %p64 = por %p62, %p63
    %s65 = ssub.s32 %s19, %s28
    %s66 = ssub.s32 %s18, %s32
    %s67 = sor.u32 %s65, %s66
    %p68 = scmp.eq.s32.totalorder %s67, 0
    %s70 = sadd.s32 %s69, 1
    %s71 = scalar_select %p68, %s69, %s70
    %p74 = pneg %p68
    %p75 = scmp.eq.s32.totalorder %s10, 1
    %p76 = por %p74, %p75
    %p77 = scmp.ne.s32.totalorder %s69, %s72
    %p78 = scmp.eq.s32.totalorder %s10, 0
    %p79 = por %p77, %p78
    %p80 = scmp.ne.s32.totalorder %s69, %s72
    %p81 = scmp.eq.s32.totalorder %s15, 1
    %p82 = por %p80, %p81
    %p83 = scmp.ne.s32.totalorder %s72, %s73
    %p84 = scmp.eq.s32.totalorder %s15, 0
    %p85 = por %p83, %p84
    %p86 = scmp.ne.s32.totalorder %s72, %s73
    %p87 = scmp.eq.s32.totalorder %s16, 1
    %p88 = por %p86, %p87
    %p90 = scmp.ne.s32.totalorder %s73, %s89
    %p91 = scmp.eq.s32.totalorder %s16, 0
    %p92 = por %p90, %p91
    %s93 = ssub.s32 %s18, %s32
    %p94 = scmp.eq.s32.totalorder %s93, 0
    %s96 = sadd.s32 %s95, 1
    %s97 = scalar_select %p94, %s95, %s96
    %p100 = pneg %p94
    %p101 = scmp.eq.s32.totalorder %s10, 1
    %p102 = por %p100, %p101
    %p103 = scmp.ne.s32.totalorder %s95, %s98
    %p104 = scmp.eq.s32.totalorder %s10, 0
    %p105 = por %p103, %p104
    %p106 = scmp.ne.s32.totalorder %s95, %s98
    %p107 = scmp.eq.s32.totalorder %s15, 1
    %p108 = por %p106, %p107
    %p109 = scmp.ne.s32.totalorder %s98, %s99
    %p110 = scmp.eq.s32.totalorder %s15, 0
    %p111 = por %p109, %p110
    %p112 = scmp.ne.s32.totalorder %s98, %s99
    %p113 = scmp.eq.s32.totalorder %s16, 1
    %p114 = por %p112, %p113
    %p116 = scmp.ne.s32.totalorder %s99, %s115
    %p117 = scmp.eq.s32.totalorder %s16, 0
    %p118 = por %p116, %p117
    %s119 = ssub.s32 %s18, %s32
    %p120 = scmp.eq.s32.totalorder %s119, 0
    %s122 = sadd.s32 %s121, 1
    %s123 = scalar_select %p120, %s121, %s122
    %p126 = pneg %p120
    %p127 = scmp.eq.s32.totalorder %s10, 1
    %p128 = por %p126, %p127
    %p129 = scmp.ne.s32.totalorder %s121, %s124
    %p130 = scmp.eq.s32.totalorder %s10, 0
    %p131 = por %p129, %p130
    %p132 = scmp.ne.s32.totalorder %s121, %s124
    %p133 = scmp.eq.s32.totalorder %s15, 1
    %p134 = por %p132, %p133
    %p135 = scmp.ne.s32.totalorder %s124, %s125
    %p136 = scmp.eq.s32.totalorder %s15, 0
    %p137 = por %p135, %p136
    %p138 = scmp.ne.s32.totalorder %s124, %s125
    %p139 = scmp.eq.s32.totalorder %s16, 1
    %p140 = por %p138, %p139
    %p142 = scmp.ne.s32.totalorder %s125, %s141
    %p143 = scmp.eq.s32.totalorder %s16, 0
    %p144 = por %p142, %p143
    %s145 = ssub.s32 %s17, %s36
    %s146 = ssub.s32 %s18, %s32
    %s147 = sor.u32 %s145, %s146
    %p148 = scmp.eq.s32.totalorder %s147, 0
    %s150 = sadd.s32 %s149, 1
    %s151 = scalar_select %p148, %s149, %s150
    %p154 = pneg %p148
    %p155 = scmp.eq.s32.totalorder %s10, 1
    %p156 = por %p154, %p155
    %p157 = scmp.ne.s32.totalorder %s149, %s152
    %p158 = scmp.eq.s32.totalorder %s10, 0
    %p159 = por %p157, %p158
    %p160 = scmp.ne.s32.totalorder %s149, %s152
    %p161 = scmp.eq.s32.totalorder %s15, 1
    %p162 = por %p160, %p161
    %p163 = scmp.ne.s32.totalorder %s152, %s153
    %p164 = scmp.eq.s32.totalorder %s15, 0
    %p165 = por %p163, %p164
    %p166 = scmp.ne.s32.totalorder %s152, %s153
    %p167 = scmp.eq.s32.totalorder %s16, 1
    %p168 = por %p166, %p167
    %p170 = scmp.ne.s32.totalorder %s153, %s169
    %p171 = scmp.eq.s32.totalorder %s16, 0
    %p172 = por %p170, %p171
    %p173 = scmp.le.s32.totalorder 1, %s10
    %p174 = scmp.lt.s32.totalorder %s10, 3
    %p175 = pnand %p173, %p174
    %p176 = pneg %p175
    // Predicated region
    $region9: #{matmul_scale_bias.1} parent=5 // pred_check
      _
    $region10: #{matmul_scale_bias.1} parent=5 // pred_check_branch
      %178 = sbr.rel (%p175) target = $region12
    $region11: #{matmul_scale_bias.1} parent=5 // pred_region
      %s179 = ssub.s32 %s10, 1
      // Predicated region
      $region13: #{matmul_scale_bias.1} parent=11 // pred_check
        %p180 = pneg %p85
      $region14: #{matmul_scale_bias.1} parent=11 // pred_check_branch
        %182 = sbr.rel (%p180) target = $region16
      $region15: #{matmul_scale_bias.1} parent=11 // pred_region
        %s183 = smul.u32 32, %s22
        %p184 = scmp.lt.s32.totalorder %s183, 31
        %s185 = scalar_select %p184, %s183, 31
        %p186 = scmp.lt.s32.totalorder %s21, 0
        %s187 = scalar_select %p186, %s21, 0
        %s188 = sadd.s32 %s187, %s185
        %s189 = smul.addr %s188, 4
        %s190 = scalar_lea.vmem %s1, %s189
        %s191 = smul.u32 32, %s22
      $region16: #{matmul_scale_bias.1} parent=11 // pred_fallthru
        _
      // Predicated region
      $region17: #{matmul_scale_bias.1} parent=11 // pred_check
        %p192 = pneg %p111
      $region18: #{matmul_scale_bias.1} parent=11 // pred_check_branch
        %194 = sbr.rel (%p192) target = $region20
      $region19: #{matmul_scale_bias.1} parent=11 // pred_region
        %p195 = scmp.lt.s32.totalorder %s21, 0
        %s196 = scalar_select %p195, %s21, 0
        %s197 = scalar_lea.vmem %s2, %s196
      $region20: #{matmul_scale_bias.1} parent=11 // pred_fallthru
        _
      // Predicated region
      $region21: #{matmul_scale_bias.1} parent=11 // pred_check
        %p198 = pneg %p137
      $region22: #{matmul_scale_bias.1} parent=11 // pred_check_branch
        %200 = sbr.rel (%p198) target = $region24
      $region23: #{matmul_scale_bias.1} parent=11 // pred_region
        %p201 = scmp.lt.s32.totalorder %s21, 0
        %s202 = scalar_select %p201, %s21, 0
        %s203 = scalar_lea.vmem %s3, %s202
      $region24: #{matmul_scale_bias.1} parent=11 // pred_fallthru
        _
    $region12: #{matmul_scale_bias.1} parent=5 // pred_fallthru
      _
    %p204 = scmp.lt.s32.totalorder %s10, 2
    // Predicated region
    $region25: #{matmul_scale_bias.1} parent=5 // pred_check
      %p205 = pneg %p204
    $region26: #{matmul_scale_bias.1} parent=5 // pred_check_branch
      %207 = sbr.rel (%p205) target = $region28
    $region27: #{matmul_scale_bias.1} parent=5 // pred_region
      // Predicated region
      $region29: #{matmul_scale_bias.1} parent=27 // pred_check
        %p208 = pneg %p51
      $region30: #{matmul_scale_bias.1} parent=27 // pred_check_branch
        %210 = sbr.rel (%p208) target = $region32
      $region31: #{matmul_scale_bias.1} parent=27 // pred_region
        %s211 = smul.u32 32, %s17
        %s212 = smul.u32 2, %s19
        %p213 = scmp.lt.s32.totalorder %s211, 63
        %s214 = scalar_select %p213, %s211, 63
        %p215 = scmp.lt.s32.totalorder %s212, 1
        %s216 = scalar_select %p215, %s212, 1
        %s217 = smul.addr %s214, 2
        %s218 = sadd.s32 %s216, %s217
        %s219 = smul.addr %s218, 4
        %s220 = scalar_lea.vmem %s0, %s219
        %s221 = smul.u32 32, %s17
        %s222 = smul.u32 2, %s19
      $region32: #{matmul_scale_bias.1} parent=27 // pred_fallthru
        _
    $region28: #{matmul_scale_bias.1} parent=5 // pred_fallthru
      _
    %p223 = scmp.le.s32.totalorder 1, %s10
    %p224 = scmp.lt.s32.totalorder %s10, 3
    %p225 = pnand %p223, %p224
    %p226 = pneg %p225
    // Predicated region
    $region33: #{matmul_scale_bias.1} parent=5 // pred_check
      _
    $region34: #{matmul_scale_bias.1} parent=5 // pred_check_branch
      %228 = sbr.rel (%p225) target = $region36
    $region35: #{matmul_scale_bias.1} parent=5 // pred_region
      %s229 = ssub.s32 %s10, 1
      %s230 = smul.u32 32, %s20
      %s231 = smul.u32 2, %s22
      %p232 = scmp.lt.s32.totalorder %s230, 63
      %s233 = scalar_select %p232, %s230, 63
      %p234 = scmp.lt.s32.totalorder %s231, 1
      %s235 = scalar_select %p234, %s231, 1
      %s236 = smul.addr %s233, 2
      %s237 = sadd.s32 %s235, %s236
      %s238 = smul.addr %s237, 4
      %s239 = scalar_lea.vmem %s0, %s238
      %p240 = pneg %p57
      %p241 = pneg %p54
      %s242 = smul.u32 32, %s22
      %p243 = scmp.lt.s32.totalorder %s242, 31
      %s244 = scalar_select %p243, %s242, 31
      %p245 = scmp.lt.s32.totalorder %s21, 0
      %s246 = scalar_select %p245, %s21, 0
      %s247 = sadd.s32 %s246, %s244
      %s248 = smul.addr %s247, 4
      %s249 = scalar_lea.vmem %s1, %s248
      %p250 = pneg %p85
      %p251 = pneg %p82
      %p252 = scmp.lt.s32.totalorder %s21, 0
      %s253 = scalar_select %p252, %s21, 0
      %s254 = scalar_lea.vmem %s2, %s253
      %p255 = pneg %p111
      %p256 = pneg %p108
      %p257 = scmp.lt.s32.totalorder %s21, 0
      %s258 = scalar_select %p257, %s21, 0
      %s259 = scalar_lea.vmem %s3, %s258
      %p260 = pneg %p137
      %p261 = pneg %p134
      %p262 = pneg %p165
      %p263 = pneg %p162
      %s264 = smul.u32 32, %s20
      %p265 = scmp.lt.s32.totalorder %s264, 63
      %s266 = scalar_select %p265, %s264, 63
      %p267 = scmp.lt.s32.totalorder %s21, 0
      %s268 = scalar_select %p267, %s21, 0
      %s269 = sadd.s32 %s268, %s266
      %s270 = smul.addr %s269, 4
      %s271 = scalar_lea.vmem %s4, %s270
      %s272 = smul.u32 32, %s20
      %s273 = smul.u32 2, %s22
      %p274 = scmp.lt.s32.totalorder %s272, 63
      %s275 = scalar_select %p274, %s272, 63
      %p276 = scmp.lt.s32.totalorder %s273, 1
      %s277 = scalar_select %p276, %s273, 1
      %s278 = smul.addr %s275, 2
      %s279 = sadd.s32 %s277, %s278
      %s280 = smul.addr %s279, 4
      %s281 = scalar_lea.vmem %s0, %s280
      %s282 = smul.u32 32, %s20
      %s283 = smul.u32 2, %s22
      %s284 = smul.u32 32, %s22
      %p285 = scmp.lt.s32.totalorder %s284, 31
      %s286 = scalar_select %p285, %s284, 31
      %p287 = scmp.lt.s32.totalorder %s21, 0
      %s288 = scalar_select %p287, %s21, 0
      %s289 = sadd.s32 %s288, %s286
      %s290 = smul.addr %s289, 4
      %s291 = scalar_lea.vmem %s1, %s290
      %s292 = smul.u32 32, %s22
      %p293 = scmp.lt.s32.totalorder %s21, 0
      %s294 = scalar_select %p293, %s21, 0
      %s295 = scalar_lea.vmem %s2, %s294
      %p296 = scmp.lt.s32.totalorder %s21, 0
      %s297 = scalar_select %p296, %s21, 0
      %s298 = scalar_lea.vmem %s3, %s297
      %s299 = smul.u32 32, %s20
      %p300 = scmp.lt.s32.totalorder %s299, 63
      %s301 = scalar_select %p300, %s299, 63
      %p302 = scmp.lt.s32.totalorder %s21, 0
      %s303 = scalar_select %p302, %s21, 0
      %s304 = sadd.s32 %s303, %s301
      %s305 = smul.addr %s304, 4
      %s306 = scalar_lea.vmem %s4, %s305
      %s307 = smul.u32 32, %s20
      %p308 = scmp.eq.s32.totalorder %s22, 0
      // Predicated region
      $region37: #{matmul_scale_bias.1} parent=35 // pred_check
        %p309 = pneg %p308
      $region38: #{matmul_scale_bias.1} parent=35 // pred_check_branch
        %311 = sbr.rel (%p309) target = $region40
      $region39: #{matmul_scale_bias.1} parent=35 // pred_region
        %312 = vst [vmem:[#allocation2] sm:$0xff] 0.0
        %313 = vst [vmem:[#allocation2 + $0x8] sm:$0xff] 0.0
        %314 = vst [vmem:[#allocation2 + $0x10] sm:$0xff] 0.0
        %315 = vst [vmem:[#allocation2 + $0x18] sm:$0xff] 0.0
        %316 = vst [vmem:[#allocation2 + $0x20] sm:$0xff] 0.0
        %317 = vst [vmem:[#allocation2 + $0x28] sm:$0xff] 0.0
        %318 = vst [vmem:[#allocation2 + $0x30] sm:$0xff] 0.0
        %319 = vst [vmem:[#allocation2 + $0x38] sm:$0xff] 0.0
        %320 = vst [vmem:[#allocation2 + $0x40] sm:$0xff] 0.0
        %321 = vst [vmem:[#allocation2 + $0x48] sm:$0xff] 0.0
        %322 = vst [vmem:[#allocation2 + $0x50] sm:$0xff] 0.0
        %323 = vst [vmem:[#allocation2 + $0x58] sm:$0xff] 0.0
        %324 = vst [vmem:[#allocation2 + $0x60] sm:$0xff] 0.0
        %325 = vst [vmem:[#allocation2 + $0x68] sm:$0xff] 0.0
        %326 = vst [vmem:[#allocation2 + $0x70] sm:$0xff] 0.0
        %327 = vst [vmem:[#allocation2 + $0x78] sm:$0xff] 0.0
        %328 = vst [vmem:[#allocation2 + $0x80] sm:$0xff] 0.0
        %329 = vst [vmem:[#allocation2 + $0x88] sm:$0xff] 0.0
        %330 = vst [vmem:[#allocation2 + $0x90] sm:$0xff] 0.0
        %331 = vst [vmem:[#allocation2 + $0x98] sm:$0xff] 0.0
        %332 = vst [vmem:[#allocation2 + $0xa0] sm:$0xff] 0.0
        %333 = vst [vmem:[#allocation2 + $0xa8] sm:$0xff] 0.0
        %334 = vst [vmem:[#allocation2 + $0xb0] sm:$0xff] 0.0
        %335 = vst [vmem:[#allocation2 + $0xb8] sm:$0xff] 0.0
        %336 = vst [vmem:[#allocation2 + $0xc0] sm:$0xff] 0.0
        %337 = vst [vmem:[#allocation2 + $0xc8] sm:$0xff] 0.0
        %338 = vst [vmem:[#allocation2 + $0xd0] sm:$0xff] 0.0
        %339 = vst [vmem:[#allocation2 + $0xd8] sm:$0xff] 0.0
        %340 = vst [vmem:[#allocation2 + $0xe0] sm:$0xff] 0.0
        %341 = vst [vmem:[#allocation2 + $0xe8] sm:$0xff] 0.0
        %342 = vst [vmem:[#allocation2 + $0xf0] sm:$0xff] 0.0
        %343 = vst [vmem:[#allocation2 + $0xf8] sm:$0xff] 0.0
      $region40: #{matmul_scale_bias.1} parent=35 // pred_fallthru
        _
      %v344 = vld [vmem:[#allocation2] sm:$0xff]
      %v345 = vld [vmem:[#allocation2 + $0x8] sm:$0xff]
      %v346 = vld [vmem:[#allocation2 + $0x10] sm:$0xff]
      %v347 = vld [vmem:[#allocation2 + $0x18] sm:$0xff]
      %v348 = vld [vmem:[#allocation2 + $0x20] sm:$0xff]
      %v349 = vld [vmem:[#allocation2 + $0x28] sm:$0xff]
      %v350 = vld [vmem:[#allocation2 + $0x30] sm:$0xff]
      %v351 = vld [vmem:[#allocation2 + $0x38] sm:$0xff]
      %v352 = vld [vmem:[#allocation2 + $0x40] sm:$0xff]
      %v353 = vld [vmem:[#allocation2 + $0x48] sm:$0xff]
      %v354 = vld [vmem:[#allocation2 + $0x50] sm:$0xff]
      %v355 = vld [vmem:[#allocation2 + $0x58] sm:$0xff]
      %v356 = vld [vmem:[#allocation2 + $0x60] sm:$0xff]
      %v357 = vld [vmem:[#allocation2 + $0x68] sm:$0xff]
      %v358 = vld [vmem:[#allocation2 + $0x70] sm:$0xff]
      %v359 = vld [vmem:[#allocation2 + $0x78] sm:$0xff]
      %v360 = vld [vmem:[#allocation2 + $0x80] sm:$0xff]
      %v361 = vld [vmem:[#allocation2 + $0x88] sm:$0xff]
      %v362 = vld [vmem:[#allocation2 + $0x90] sm:$0xff]
      %v363 = vld [vmem:[#allocation2 + $0x98] sm:$0xff]
      %v364 = vld [vmem:[#allocation2 + $0xa0] sm:$0xff]
      %v365 = vld [vmem:[#allocation2 + $0xa8] sm:$0xff]
      %v366 = vld [vmem:[#allocation2 + $0xb0] sm:$0xff]
      %v367 = vld [vmem:[#allocation2 + $0xb8] sm:$0xff]
      %v368 = vld [vmem:[#allocation2 + $0xc0] sm:$0xff]
      %v369 = vld [vmem:[#allocation2 + $0xc8] sm:$0xff]
      %v370 = vld [vmem:[#allocation2 + $0xd0] sm:$0xff]
      %v371 = vld [vmem:[#allocation2 + $0xd8] sm:$0xff]
      %v372 = vld [vmem:[#allocation2 + $0xe0] sm:$0xff]
      %v373 = vld [vmem:[#allocation2 + $0xe8] sm:$0xff]
      %v374 = vld [vmem:[#allocation2 + $0xf0] sm:$0xff]
      %v375 = vld [vmem:[#allocation2 + $0xf8] sm:$0xff]
      %v376 = vld [vmem:[%s281] sm:$0xff]
      %v377 = vld [vmem:[%s281 + $0x8] sm:$0xff]
      %v378 = vld [vmem:[%s281 + $0x10] sm:$0xff]
      %v379 = vld [vmem:[%s281 + $0x18] sm:$0xff]
      %v380 = vld [vmem:[%s281 + $0x20] sm:$0xff]
      %v381 = vld [vmem:[%s281 + $0x28] sm:$0xff]
      %v382 = vld [vmem:[%s281 + $0x30] sm:$0xff]
      %v383 = vld [vmem:[%s281 + $0x38] sm:$0xff]
      %v384 = vld [vmem:[%s281 + $0x40] sm:$0xff]
      %v385 = vld [vmem:[%s281 + $0x48] sm:$0xff]
      %v386 = vld [vmem:[%s281 + $0x50] sm:$0xff]
      %v387 = vld [vmem:[%s281 + $0x58] sm:$0xff]
      %v388 = vld [vmem:[%s281 + $0x60] sm:$0xff]
      %v389 = vld [vmem:[%s281 + $0x68] sm:$0xff]
      %v390 = vld [vmem:[%s281 + $0x70] sm:$0xff]
      %v391 = vld [vmem:[%s281 + $0x78] sm:$0xff]
      %v392 = vld [vmem:[%s281 + $0x80] sm:$0xff]
      %v393 = vld [vmem:[%s281 + $0x88] sm:$0xff]
      %v394 = vld [vmem:[%s281 + $0x90] sm:$0xff]
      %v395 = vld [vmem:[%s281 + $0x98] sm:$0xff]
      %v396 = vld [vmem:[%s281 + $0xa0] sm:$0xff]
      %v397 = vld [vmem:[%s281 + $0xa8] sm:$0xff]
      %v398 = vld [vmem:[%s281 + $0xb0] sm:$0xff]
      %v399 = vld [vmem:[%s281 + $0xb8] sm:$0xff]
      %v400 = vld [vmem:[%s281 + $0xc0] sm:$0xff]
      %v401 = vld [vmem:[%s281 + $0xc8] sm:$0xff]
      %v402 = vld [vmem:[%s281 + $0xd0] sm:$0xff]
      %v403 = vld [vmem:[%s281 + $0xd8] sm:$0xff]
      %v404 = vld [vmem:[%s281 + $0xe0] sm:$0xff]
      %v405 = vld [vmem:[%s281 + $0xe8] sm:$0xff]
      %v406 = vld [vmem:[%s281 + $0xf0] sm:$0xff]
      %v407 = vld [vmem:[%s281 + $0xf8] sm:$0xff]
      %v408 = vld [vmem:[%s291] sm:$0xf]
      %v409 = vld [vmem:[%s291 + $0x4] sm:$0xf]
      %v410 = vld [vmem:[%s291 + $0x8] sm:$0xf]
      %v411 = vld [vmem:[%s291 + $0xc] sm:$0xf]
      %v412 = vld [vmem:[%s291 + $0x10] sm:$0xf]
      %v413 = vld [vmem:[%s291 + $0x14] sm:$0xf]
      %v414 = vld [vmem:[%s291 + $0x18] sm:$0xf]
      %v415 = vld [vmem:[%s291 + $0x1c] sm:$0xf]
      %v416 = vld [vmem:[%s291 + $0x20] sm:$0xf]
      %v417 = vld [vmem:[%s291 + $0x24] sm:$0xf]
      %v418 = vld [vmem:[%s291 + $0x28] sm:$0xf]
      %v419 = vld [vmem:[%s291 + $0x2c] sm:$0xf]
      %v420 = vld [vmem:[%s291 + $0x30] sm:$0xf]
      %v421 = vld [vmem:[%s291 + $0x34] sm:$0xf]
      %v422 = vld [vmem:[%s291 + $0x38] sm:$0xf]
      %v423 = vld [vmem:[%s291 + $0x3c] sm:$0xf]
      %v424 = vld [vmem:[%s291 + $0x40] sm:$0xf]
      %v425 = vld [vmem:[%s291 + $0x44] sm:$0xf]
      %v426 = vld [vmem:[%s291 + $0x48] sm:$0xf]
      %v427 = vld [vmem:[%s291 + $0x4c] sm:$0xf]
      %v428 = vld [vmem:[%s291 + $0x50] sm:$0xf]
      %v429 = vld [vmem:[%s291 + $0x54] sm:$0xf]
      %v430 = vld [vmem:[%s291 + $0x58] sm:$0xf]
      %v431 = vld [vmem:[%s291 + $0x5c] sm:$0xf]
      %v432 = vld [vmem:[%s291 + $0x60] sm:$0xf]
      %v433 = vld [vmem:[%s291 + $0x64] sm:$0xf]
      %v434 = vld [vmem:[%s291 + $0x68] sm:$0xf]
      %v435 = vld [vmem:[%s291 + $0x6c] sm:$0xf]
      %v436 = vld [vmem:[%s291 + $0x70] sm:$0xf]
      %v437 = vld [vmem:[%s291 + $0x74] sm:$0xf]
      %v438 = vld [vmem:[%s291 + $0x78] sm:$0xf]
      %v439 = vld [vmem:[%s291 + $0x7c] sm:$0xf]
      %v472 = vunpack.c.l.b16 %v376
      %v473 = vunpack.c.h.b16 %v376
      %v474 = vunpack.c.l.b16 %v377
      %v475 = vunpack.c.h.b16 %v377
      %v476 = vunpack.c.l.b16 %v378
      %v477 = vunpack.c.h.b16 %v378
      %v478 = vunpack.c.l.b16 %v379
      %v479 = vunpack.c.h.b16 %v379
      %v480 = vunpack.c.l.b16 %v380
      %v481 = vunpack.c.h.b16 %v380
      %v482 = vunpack.c.l.b16 %v381
      %v483 = vunpack.c.h.b16 %v381
      %v484 = vunpack.c.l.b16 %v382
      %v485 = vunpack.c.h.b16 %v382
      %v486 = vunpack.c.l.b16 %v383
      %v487 = vunpack.c.h.b16 %v383
      %v488 = vunpack.c.l.b16 %v384
      %v489 = vunpack.c.h.b16 %v384
      %v490 = vunpack.c.l.b16 %v385
      %v491 = vunpack.c.h.b16 %v385
      %v492 = vunpack.c.l.b16 %v386
      %v493 = vunpack.c.h.b16 %v386
      %v494 = vunpack.c.l.b16 %v387
      %v495 = vunpack.c.h.b16 %v387
      %v496 = vunpack.c.l.b16 %v388
      %v497 = vunpack.c.h.b16 %v388
      %v498 = vunpack.c.l.b16 %v389
      %v499 = vunpack.c.h.b16 %v389
      %v500 = vunpack.c.l.b16 %v390
      %v501 = vunpack.c.h.b16 %v390
      %v502 = vunpack.c.l.b16 %v391
      %v503 = vunpack.c.h.b16 %v391
      %v504 = vunpack.c.l.b16 %v392
      %v505 = vunpack.c.h.b16 %v392
      %v506 = vunpack.c.l.b16 %v393
      %v507 = vunpack.c.h.b16 %v393
      %v508 = vunpack.c.l.b16 %v394
      %v509 = vunpack.c.h.b16 %v394
      %v510 = vunpack.c.l.b16 %v395
      %v511 = vunpack.c.h.b16 %v395
      %v512 = vunpack.c.l.b16 %v396
      %v513 = vunpack.c.h.b16 %v396
      %v514 = vunpack.c.l.b16 %v397
      %v515 = vunpack.c.h.b16 %v397
      %v516 = vunpack.c.l.b16 %v398
      %v517 = vunpack.c.h.b16 %v398
      %v518 = vunpack.c.l.b16 %v399
      %v519 = vunpack.c.h.b16 %v399
      %v520 = vunpack.c.l.b16 %v400
      %v521 = vunpack.c.h.b16 %v400
      %v522 = vunpack.c.l.b16 %v401
      %v523 = vunpack.c.h.b16 %v401
      %v524 = vunpack.c.l.b16 %v402
      %v525 = vunpack.c.h.b16 %v402
      %v526 = vunpack.c.l.b16 %v403
      %v527 = vunpack.c.h.b16 %v403
      %v528 = vunpack.c.l.b16 %v404
      %v529 = vunpack.c.h.b16 %v404
      %v530 = vunpack.c.l.b16 %v405
      %v531 = vunpack.c.h.b16 %v405
      %v532 = vunpack.c.l.b16 %v406
      %v533 = vunpack.c.h.b16 %v406
      %v534 = vunpack.c.l.b16 %v407
      %v535 = vunpack.c.h.b16 %v407
      %v536 = vpack.c.b16 %v474, %v472
      %v537 = vpack.c.b16 %v475, %v473
      %v538 = vpack.c.b16 %v478, %v476
      %v539 = vpack.c.b16 %v479, %v477
      %v540 = vpack.c.b16 %v482, %v480
      %v541 = vpack.c.b16 %v483, %v481
      %v542 = vpack.c.b16 %v486, %v484
      %v543 = vpack.c.b16 %v487, %v485
      %v544 = vpack.c.b16 %v490, %v488
      %v545 = vpack.c.b16 %v491, %v489
      %v546 = vpack.c.b16 %v494, %v492
      %v547 = vpack.c.b16 %v495, %v493
      %v548 = vpack.c.b16 %v498, %v496
      %v549 = vpack.c.b16 %v499, %v497
      %v550 = vpack.c.b16 %v502, %v500
      %v551 = vpack.c.b16 %v503, %v501
      %v552 = vpack.c.b16 %v506, %v504
      %v553 = vpack.c.b16 %v507, %v505
      %v554 = vpack.c.b16 %v510, %v508
      %v555 = vpack.c.b16 %v511, %v509
      %v556 = vpack.c.b16 %v514, %v512
      %v557 = vpack.c.b16 %v515, %v513
      %v558 = vpack.c.b16 %v518, %v516
      %v559 = vpack.c.b16 %v519, %v517
      %v560 = vpack.c.b16 %v522, %v520
      %v561 = vpack.c.b16 %v523, %v521
      %v562 = vpack.c.b16 %v526, %v524
      %v563 = vpack.c.b16 %v527, %v525
      %v564 = vpack.c.b16 %v530, %v528
      %v565 = vpack.c.b16 %v531, %v529
      %v566 = vpack.c.b16 %v534, %v532
      %v567 = vpack.c.b16 %v535, %v533
      %v632 = vunpack.c.l.b16 %v408
      %v633 = vunpack.c.l.b16 %v409
      %v634 = vunpack.c.l.b16 %v410
      %v635 = vunpack.c.l.b16 %v411
      %v636 = vunpack.c.l.b16 %v412
      %v637 = vunpack.c.l.b16 %v413
      %v638 = vunpack.c.l.b16 %v414
      %v639 = vunpack.c.l.b16 %v415
      %v640 = vunpack.c.l.b16 %v416
      %v641 = vunpack.c.l.b16 %v417
      %v642 = vunpack.c.l.b16 %v418
      %v643 = vunpack.c.l.b16 %v419
      %v644 = vunpack.c.l.b16 %v420
      %v645 = vunpack.c.l.b16 %v421
      %v646 = vunpack.c.l.b16 %v422
      %v647 = vunpack.c.l.b16 %v423
      %v648 = vunpack.c.l.b16 %v424
      %v649 = vunpack.c.l.b16 %v425
      %v650 = vunpack.c.l.b16 %v426
      %v651 = vunpack.c.l.b16 %v427
      %v652 = vunpack.c.l.b16 %v428
      %v653 = vunpack.c.l.b16 %v429
      %v654 = vunpack.c.l.b16 %v430
      %v655 = vunpack.c.l.b16 %v431
      %v656 = vunpack.c.l.b16 %v432
      %v657 = vunpack.c.l.b16 %v433
      %v658 = vunpack.c.l.b16 %v434
      %v659 = vunpack.c.l.b16 %v435
      %v660 = vunpack.c.l.b16 %v436
      %v661 = vunpack.c.l.b16 %v437
      %v662 = vunpack.c.l.b16 %v438
      %v663 = vunpack.c.l.b16 %v439
      %v664 = vpack.c.b16 %v633, %v632
      %v665 = vpack.c.b16 %v635, %v634
      %v666 = vpack.c.b16 %v637, %v636
      %v667 = vpack.c.b16 %v639, %v638
      %v668 = vpack.c.b16 %v641, %v640
      %v669 = vpack.c.b16 %v643, %v642
      %v670 = vpack.c.b16 %v645, %v644
      %v671 = vpack.c.b16 %v647, %v646
      %v672 = vpack.c.b16 %v649, %v648
      %v673 = vpack.c.b16 %v651, %v650
      %v674 = vpack.c.b16 %v653, %v652
      %v675 = vpack.c.b16 %v655, %v654
      %v676 = vpack.c.b16 %v657, %v656
      %v677 = vpack.c.b16 %v659, %v658
      %v678 = vpack.c.b16 %v661, %v660
      %v679 = vpack.c.b16 %v663, %v662
      %696 = vmatpush.bf16.msra.mxu0 %v671
      %697 = vmatpush.bf16.msra.mxu0 %v670
      %698 = vmatpush.bf16.msra.mxu0 %v669
      %699 = vmatpush.bf16.msra.mxu0 %v668
      %700 = vmatpush.bf16.msra.mxu0 %v667
      %701 = vmatpush.bf16.msra.mxu0 %v666
      %702 = vmatpush.bf16.msra.mxu0 %v665
      %703 = vmatpush.bf16.msra.mxu0 %v664
      %704 = vmatmul.bf16.gmra.mxu0 %v536
      %v705 = vpop.f32.mrf.mxu0
      %v706 = vadd.f32 0.0, %v705
      %v707 = vpop.f32.mrf.mxu0
      %v708 = vadd.f32 0.0, %v707
      %709 = vmatmul.bf16.gmra.mxu0 %v538
      %v710 = vpop.f32.mrf.mxu0
      %v711 = vadd.f32 0.0, %v710
      %v712 = vpop.f32.mrf.mxu0
      %v713 = vadd.f32 0.0, %v712
      %714 = vmatmul.bf16.gmra.mxu0 %v540
      %v715 = vpop.f32.mrf.mxu0
      %v716 = vadd.f32 0.0, %v715
      %v717 = vpop.f32.mrf.mxu0
      %v718 = vadd.f32 0.0, %v717
      %719 = vmatmul.bf16.gmra.mxu0 %v542
      %v720 = vpop.f32.mrf.mxu0
      %v721 = vadd.f32 0.0, %v720
      %v722 = vpop.f32.mrf.mxu0
      %v723 = vadd.f32 0.0, %v722
      %724 = vmatmul.bf16.gmra.mxu0 %v544
      %v725 = vpop.f32.mrf.mxu0
      %v726 = vadd.f32 0.0, %v725
      %v727 = vpop.f32.mrf.mxu0
      %v728 = vadd.f32 0.0, %v727
      %729 = vmatmul.bf16.gmra.mxu0 %v546
      %v730 = vpop.f32.mrf.mxu0
      %v731 = vadd.f32 0.0, %v730
      %v732 = vpop.f32.mrf.mxu0
      %v733 = vadd.f32 0.0, %v732
      %734 = vmatmul.bf16.gmra.mxu0 %v548
      %v735 = vpop.f32.mrf.mxu0
      %v736 = vadd.f32 0.0, %v735
      %v737 = vpop.f32.mrf.mxu0
      %v738 = vadd.f32 0.0, %v737
      %739 = vmatmul.bf16.gmra.mxu0 %v550
      %v740 = vpop.f32.mrf.mxu0
      %v741 = vadd.f32 0.0, %v740
      %v742 = vpop.f32.mrf.mxu0
      %v743 = vadd.f32 0.0, %v742
      %744 = vmatmul.bf16.gmra.mxu0 %v552
      %v745 = vpop.f32.mrf.mxu0
      %v746 = vadd.f32 0.0, %v745
      %v747 = vpop.f32.mrf.mxu0
      %v748 = vadd.f32 0.0, %v747
      %749 = vmatmul.bf16.gmra.mxu0 %v554
      %v750 = vpop.f32.mrf.mxu0
      %v751 = vadd.f32 0.0, %v750
      %v752 = vpop.f32.mrf.mxu0
      %v753 = vadd.f32 0.0, %v752
      %754 = vmatmul.bf16.gmra.mxu0 %v556
      %v755 = vpop.f32.mrf.mxu0
      %v756 = vadd.f32 0.0, %v755
      %v757 = vpop.f32.mrf.mxu0
      %v758 = vadd.f32 0.0, %v757
      %759 = vmatmul.bf16.gmra.mxu0 %v558
      %v760 = vpop.f32.mrf.mxu0
      %v761 = vadd.f32 0.0, %v760
      %v762 = vpop.f32.mrf.mxu0
      %v763 = vadd.f32 0.0, %v762
      %764 = vmatmul.bf16.gmra.mxu0 %v560
      %v765 = vpop.f32.mrf.mxu0
      %v766 = vadd.f32 0.0, %v765
      %v767 = vpop.f32.mrf.mxu0
      %v768 = vadd.f32 0.0, %v767
      %769 = vmatmul.bf16.gmra.mxu0 %v562
      %v770 = vpop.f32.mrf.mxu0
      %v771 = vadd.f32 0.0, %v770
      %v772 = vpop.f32.mrf.mxu0
      %v773 = vadd.f32 0.0, %v772
      %774 = vmatmul.bf16.gmra.mxu0 %v564
      %v775 = vpop.f32.mrf.mxu0
      %v776 = vadd.f32 0.0, %v775
      %v777 = vpop.f32.mrf.mxu0
      %v778 = vadd.f32 0.0, %v777
      %779 = vmatmul.bf16.gmra.mxu0 %v566
      %v780 = vpop.f32.mrf.mxu0
      %v781 = vadd.f32 0.0, %v780
      %v782 = vpop.f32.mrf.mxu0
      %v783 = vadd.f32 0.0, %v782
      %784 = vdwg.mxu0
      %785 = vmatpush.bf16.msra.mxu0 %v679
      %786 = vmatpush.bf16.msra.mxu0 %v678
      %787 = vmatpush.bf16.msra.mxu0 %v677
      %788 = vmatpush.bf16.msra.mxu0 %v676
      %789 = vmatpush.bf16.msra.mxu0 %v675
      %790 = vmatpush.bf16.msra.mxu0 %v674
      %791 = vmatpush.bf16.msra.mxu0 %v673
      %792 = vmatpush.bf16.msra.mxu0 %v672
      %793 = vmatmul.bf16.gmra.mxu0 %v537
      %v794 = vpop.f32.mrf.mxu0
      %v795 = vadd.f32 %v706, %v794
      %v796 = vpop.f32.mrf.mxu0
      %v797 = vadd.f32 %v708, %v796
      %798 = vmatmul.bf16.gmra.mxu0 %v539
      %v799 = vpop.f32.mrf.mxu0
      %v800 = vadd.f32 %v711, %v799
      %v801 = vpop.f32.mrf.mxu0
      %v802 = vadd.f32 %v713, %v801
      %803 = vmatmul.bf16.gmra.mxu0 %v541
      %v804 = vpop.f32.mrf.mxu0
      %v805 = vadd.f32 %v716, %v804
      %v806 = vpop.f32.mrf.mxu0
      %v807 = vadd.f32 %v718, %v806
      %808 = vmatmul.bf16.gmra.mxu0 %v543
      %v809 = vpop.f32.mrf.mxu0
      %v810 = vadd.f32 %v721, %v809
      %v811 = vpop.f32.mrf.mxu0
      %v812 = vadd.f32 %v723, %v811
      %813 = vmatmul.bf16.gmra.mxu0 %v545
      %v814 = vpop.f32.mrf.mxu0
      %v815 = vadd.f32 %v726, %v814
      %v816 = vpop.f32.mrf.mxu0
      %v817 = vadd.f32 %v728, %v816
      %818 = vmatmul.bf16.gmra.mxu0 %v547
      %v819 = vpop.f32.mrf.mxu0
      %v820 = vadd.f32 %v731, %v819
      %v821 = vpop.f32.mrf.mxu0
      %v822 = vadd.f32 %v733, %v821
      %823 = vmatmul.bf16.gmra.mxu0 %v549
      %v824 = vpop.f32.mrf.mxu0
      %v825 = vadd.f32 %v736, %v824
      %v826 = vpop.f32.mrf.mxu0
      %v827 = vadd.f32 %v738, %v826
      %828 = vmatmul.bf16.gmra.mxu0 %v551
      %v829 = vpop.f32.mrf.mxu0
      %v830 = vadd.f32 %v741, %v829
      %v831 = vpop.f32.mrf.mxu0
      %v832 = vadd.f32 %v743, %v831
      %833 = vmatmul.bf16.gmra.mxu0 %v553
      %v834 = vpop.f32.mrf.mxu0
      %v835 = vadd.f32 %v746, %v834
      %v836 = vpop.f32.mrf.mxu0
      %v837 = vadd.f32 %v748, %v836
      %838 = vmatmul.bf16.gmra.mxu0 %v555
      %v839 = vpop.f32.mrf.mxu0
      %v840 = vadd.f32 %v751, %v839
      %v841 = vpop.f32.mrf.mxu0
      %v842 = vadd.f32 %v753, %v841
      %843 = vmatmul.bf16.gmra.mxu0 %v557
      %v844 = vpop.f32.mrf.mxu0
      %v845 = vadd.f32 %v756, %v844
      %v846 = vpop.f32.mrf.mxu0
      %v847 = vadd.f32 %v758, %v846
      %848 = vmatmul.bf16.gmra.mxu0 %v559
      %v849 = vpop.f32.mrf.mxu0
      %v850 = vadd.f32 %v761, %v849
      %v851 = vpop.f32.mrf.mxu0
      %v852 = vadd.f32 %v763, %v851
      %853 = vmatmul.bf16.gmra.mxu0 %v561
      %v854 = vpop.f32.mrf.mxu0
      %v855 = vadd.f32 %v766, %v854
      %v856 = vpop.f32.mrf.mxu0
      %v857 = vadd.f32 %v768, %v856
      %858 = vmatmul.bf16.gmra.mxu0 %v563
      %v859 = vpop.f32.mrf.mxu0
      %v860 = vadd.f32 %v771, %v859
      %v861 = vpop.f32.mrf.mxu0
      %v862 = vadd.f32 %v773, %v861
      %863 = vmatmul.bf16.gmra.mxu0 %v565
      %v864 = vpop.f32.mrf.mxu0
      %v865 = vadd.f32 %v776, %v864
      %v866 = vpop.f32.mrf.mxu0
      %v867 = vadd.f32 %v778, %v866
      %868 = vmatmul.bf16.gmra.mxu0 %v567
      %v869 = vpop.f32.mrf.mxu0
      %v870 = vadd.f32 %v781, %v869
      %v871 = vpop.f32.mrf.mxu0
      %v872 = vadd.f32 %v783, %v871
      %873 = vdwg.mxu0
      %v874 = vadd.f32 %v344, %v795
      %v875 = vadd.f32 %v345, %v797
      %v876 = vadd.f32 %v346, %v800
      %v877 = vadd.f32 %v347, %v802
      %v878 = vadd.f32 %v348, %v805
      %v879 = vadd.f32 %v349, %v807
      %v880 = vadd.f32 %v350, %v810
      %v881 = vadd.f32 %v351, %v812
      %v882 = vadd.f32 %v352, %v815
      %v883 = vadd.f32 %v353, %v817
      %v884 = vadd.f32 %v354, %v820
      %v885 = vadd.f32 %v355, %v822
      %v886 = vadd.f32 %v356, %v825
      %v887 = vadd.f32 %v357, %v827
      %v888 = vadd.f32 %v358, %v830
      %v889 = vadd.f32 %v359, %v832
      %v890 = vadd.f32 %v360, %v835
      %v891 = vadd.f32 %v361, %v837
      %v892 = vadd.f32 %v362, %v840
      %v893 = vadd.f32 %v363, %v842
      %v894 = vadd.f32 %v364, %v845
      %v895 = vadd.f32 %v365, %v847
      %v896 = vadd.f32 %v366, %v850
      %v897 = vadd.f32 %v367, %v852
      %v898 = vadd.f32 %v368, %v855
      %v899 = vadd.f32 %v369, %v857
      %v900 = vadd.f32 %v370, %v860
      %v901 = vadd.f32 %v371, %v862
      %v902 = vadd.f32 %v372, %v865
      %v903 = vadd.f32 %v373, %v867
      %v904 = vadd.f32 %v374, %v870
      %v905 = vadd.f32 %v375, %v872
      %906 = vst [vmem:[#allocation2] sm:$0xff] %v874
      %907 = vst [vmem:[#allocation2 + $0x8] sm:$0xff] %v875
      %908 = vst [vmem:[#allocation2 + $0x10] sm:$0xff] %v876
      %909 = vst [vmem:[#allocation2 + $0x18] sm:$0xff] %v877
      %910 = vst [vmem:[#allocation2 + $0x20] sm:$0xff] %v878
      %911 = vst [vmem:[#allocation2 + $0x28] sm:$0xff] %v879
      %912 = vst [vmem:[#allocation2 + $0x30] sm:$0xff] %v880
      %913 = vst [vmem:[#allocation2 + $0x38] sm:$0xff] %v881
      %914 = vst [vmem:[#allocation2 + $0x40] sm:$0xff] %v882
      %915 = vst [vmem:[#allocation2 + $0x48] sm:$0xff] %v883
      %916 = vst [vmem:[#allocation2 + $0x50] sm:$0xff] %v884
      %917 = vst [vmem:[#allocation2 + $0x58] sm:$0xff] %v885
      %918 = vst [vmem:[#allocation2 + $0x60] sm:$0xff] %v886
      %919 = vst [vmem:[#allocation2 + $0x68] sm:$0xff] %v887
      %920 = vst [vmem:[#allocation2 + $0x70] sm:$0xff] %v888
      %921 = vst [vmem:[#allocation2 + $0x78] sm:$0xff] %v889
      %922 = vst [vmem:[#allocation2 + $0x80] sm:$0xff] %v890
      %923 = vst [vmem:[#allocation2 + $0x88] sm:$0xff] %v891
      %924 = vst [vmem:[#allocation2 + $0x90] sm:$0xff] %v892
      %925 = vst [vmem:[#allocation2 + $0x98] sm:$0xff] %v893
      %926 = vst [vmem:[#allocation2 + $0xa0] sm:$0xff] %v894
      %927 = vst [vmem:[#allocation2 + $0xa8] sm:$0xff] %v895
      %928 = vst [vmem:[#allocation2 + $0xb0] sm:$0xff] %v896
      %929 = vst [vmem:[#allocation2 + $0xb8] sm:$0xff] %v897
      %930 = vst [vmem:[#allocation2 + $0xc0] sm:$0xff] %v898
      %931 = vst [vmem:[#allocation2 + $0xc8] sm:$0xff] %v899
      %932 = vst [vmem:[#allocation2 + $0xd0] sm:$0xff] %v900
      %933 = vst [vmem:[#allocation2 + $0xd8] sm:$0xff] %v901
      %934 = vst [vmem:[#allocation2 + $0xe0] sm:$0xff] %v902
      %935 = vst [vmem:[#allocation2 + $0xe8] sm:$0xff] %v903
      %936 = vst [vmem:[#allocation2 + $0xf0] sm:$0xff] %v904
      %937 = vst [vmem:[#allocation2 + $0xf8] sm:$0xff] %v905
      // Predicated region
      $region41: #{matmul_scale_bias.1} parent=35 // pred_check
        %p938 = pneg %p308
      $region42: #{matmul_scale_bias.1} parent=35 // pred_check_branch
        %940 = sbr.rel (%p938) target = $region44
      $region43: #{matmul_scale_bias.1} parent=35 // pred_region
        %v941 = vld [vmem:[#allocation2] sm:$0xff]
        %v942 = vld [vmem:[#allocation2 + $0x8] sm:$0xff]
        %v943 = vld [vmem:[#allocation2 + $0x10] sm:$0xff]
        %v944 = vld [vmem:[#allocation2 + $0x18] sm:$0xff]
        %v945 = vld [vmem:[#allocation2 + $0x20] sm:$0xff]
        %v946 = vld [vmem:[#allocation2 + $0x28] sm:$0xff]
        %v947 = vld [vmem:[#allocation2 + $0x30] sm:$0xff]
        %v948 = vld [vmem:[#allocation2 + $0x38] sm:$0xff]
        %v949 = vld [vmem:[#allocation2 + $0x40] sm:$0xff]
        %v950 = vld [vmem:[#allocation2 + $0x48] sm:$0xff]
        %v951 = vld [vmem:[#allocation2 + $0x50] sm:$0xff]
        %v952 = vld [vmem:[#allocation2 + $0x58] sm:$0xff]
        %v953 = vld [vmem:[#allocation2 + $0x60] sm:$0xff]
        %v954 = vld [vmem:[#allocation2 + $0x68] sm:$0xff]
        %v955 = vld [vmem:[#allocation2 + $0x70] sm:$0xff]
        %v956 = vld [vmem:[#allocation2 + $0x78] sm:$0xff]
        %v957 = vld [vmem:[#allocation2 + $0x80] sm:$0xff]
        %v958 = vld [vmem:[#allocation2 + $0x88] sm:$0xff]
        %v959 = vld [vmem:[#allocation2 + $0x90] sm:$0xff]
        %v960 = vld [vmem:[#allocation2 + $0x98] sm:$0xff]
        %v961 = vld [vmem:[#allocation2 + $0xa0] sm:$0xff]
        %v962 = vld [vmem:[#allocation2 + $0xa8] sm:$0xff]
        %v963 = vld [vmem:[#allocation2 + $0xb0] sm:$0xff]
        %v964 = vld [vmem:[#allocation2 + $0xb8] sm:$0xff]
        %v965 = vld [vmem:[#allocation2 + $0xc0] sm:$0xff]
        %v966 = vld [vmem:[#allocation2 + $0xc8] sm:$0xff]
        %v967 = vld [vmem:[#allocation2 + $0xd0] sm:$0xff]
        %v968 = vld [vmem:[#allocation2 + $0xd8] sm:$0xff]
        %v969 = vld [vmem:[#allocation2 + $0xe0] sm:$0xff]
        %v970 = vld [vmem:[#allocation2 + $0xe8] sm:$0xff]
        %v971 = vld [vmem:[#allocation2 + $0xf0] sm:$0xff]
        %v972 = vld [vmem:[#allocation2 + $0xf8] sm:$0xff]
        %v973 = vld [vmem:[%s295] sm:$0x1]
        %v975 = vperm.slane %v973, 0
        %v977 = vmul.f32 %v941, %v975
        %v978 = vmul.f32 %v942, %v975
        %v979 = vmul.f32 %v943, %v975
        %v980 = vmul.f32 %v944, %v975
        %v981 = vmul.f32 %v945, %v975
        %v982 = vmul.f32 %v946, %v975
        %v983 = vmul.f32 %v947, %v975
        %v984 = vmul.f32 %v948, %v975
        %v985 = vmul.f32 %v949, %v975
        %v986 = vmul.f32 %v950, %v975
        %v987 = vmul.f32 %v951, %v975
        %v988 = vmul.f32 %v952, %v975
        %v989 = vmul.f32 %v953, %v975
        %v990 = vmul.f32 %v954, %v975
        %v991 = vmul.f32 %v955, %v975
        %v992 = vmul.f32 %v956, %v975
        %v993 = vmul.f32 %v957, %v975
        %v994 = vmul.f32 %v958, %v975
        %v995 = vmul.f32 %v959, %v975
        %v996 = vmul.f32 %v960, %v975
        %v997 = vmul.f32 %v961, %v975
        %v998 = vmul.f32 %v962, %v975
        %v999 = vmul.f32 %v963, %v975
        %v1000 = vmul.f32 %v964, %v975
        %v1001 = vmul.f32 %v965, %v975
        %v1002 = vmul.f32 %v966, %v975
        %v1003 = vmul.f32 %v967, %v975
        %v1004 = vmul.f32 %v968, %v975
        %v1005 = vmul.f32 %v969, %v975
        %v1006 = vmul.f32 %v970, %v975
        %v1007 = vmul.f32 %v971, %v975
        %v1008 = vmul.f32 %v972, %v975
        %v1009 = vld [vmem:[%s298] sm:$0x1]
        %v1011 = vperm.slane %v1009, 0
        %v1013 = vadd.f32 %v977, %v1011
        %v1014 = vadd.f32 %v978, %v1011
        %v1015 = vadd.f32 %v979, %v1011
        %v1016 = vadd.f32 %v980, %v1011
        %v1017 = vadd.f32 %v981, %v1011
        %v1018 = vadd.f32 %v982, %v1011
        %v1019 = vadd.f32 %v983, %v1011
        %v1020 = vadd.f32 %v984, %v1011
        %v1021 = vadd.f32 %v985, %v1011
        %v1022 = vadd.f32 %v986, %v1011
        %v1023 = vadd.f32 %v987, %v1011
        %v1024 = vadd.f32 %v988, %v1011
        %v1025 = vadd.f32 %v989, %v1011
        %v1026 = vadd.f32 %v990, %v1011
        %v1027 = vadd.f32 %v991, %v1011
        %v1028 = vadd.f32 %v992, %v1011
        %v1029 = vadd.f32 %v993, %v1011
        %v1030 = vadd.f32 %v994, %v1011
        %v1031 = vadd.f32 %v995, %v1011
        %v1032 = vadd.f32 %v996, %v1011
        %v1033 = vadd.f32 %v997, %v1011
        %v1034 = vadd.f32 %v998, %v1011
        %v1035 = vadd.f32 %v999, %v1011
        %v1036 = vadd.f32 %v1000, %v1011
        %v1037 = vadd.f32 %v1001, %v1011
        %v1038 = vadd.f32 %v1002, %v1011
        %v1039 = vadd.f32 %v1003, %v1011
        %v1040 = vadd.f32 %v1004, %v1011
        %v1041 = vadd.f32 %v1005, %v1011
        %v1042 = vadd.f32 %v1006, %v1011
        %v1043 = vadd.f32 %v1007, %v1011
        %v1044 = vadd.f32 %v1008, %v1011
        %v1045 = vmax.f32 %v1013, 0.0
        %v1046 = vmax.f32 %v1014, 0.0
        %v1047 = vmax.f32 %v1015, 0.0
        %v1048 = vmax.f32 %v1016, 0.0
        %v1049 = vmax.f32 %v1017, 0.0
        %v1050 = vmax.f32 %v1018, 0.0
        %v1051 = vmax.f32 %v1019, 0.0
        %v1052 = vmax.f32 %v1020, 0.0
        %v1053 = vmax.f32 %v1021, 0.0
        %v1054 = vmax.f32 %v1022, 0.0
        %v1055 = vmax.f32 %v1023, 0.0
        %v1056 = vmax.f32 %v1024, 0.0
        %v1057 = vmax.f32 %v1025, 0.0
        %v1058 = vmax.f32 %v1026, 0.0
        %v1059 = vmax.f32 %v1027, 0.0
        %v1060 = vmax.f32 %v1028, 0.0
        %v1061 = vmax.f32 %v1029, 0.0
        %v1062 = vmax.f32 %v1030, 0.0
        %v1063 = vmax.f32 %v1031, 0.0
        %v1064 = vmax.f32 %v1032, 0.0
        %v1065 = vmax.f32 %v1033, 0.0
        %v1066 = vmax.f32 %v1034, 0.0
        %v1067 = vmax.f32 %v1035, 0.0
        %v1068 = vmax.f32 %v1036, 0.0
        %v1069 = vmax.f32 %v1037, 0.0
        %v1070 = vmax.f32 %v1038, 0.0
        %v1071 = vmax.f32 %v1039, 0.0
        %v1072 = vmax.f32 %v1040, 0.0
        %v1073 = vmax.f32 %v1041, 0.0
        %v1074 = vmax.f32 %v1042, 0.0
        %v1075 = vmax.f32 %v1043, 0.0
        %v1076 = vmax.f32 %v1044, 0.0
        %v1077 = vpack.c.bf16 %v1045, %v1045
        %v1078 = vpack.c.bf16 %v1046, %v1046
        %v1079 = vpack.c.bf16 %v1047, %v1047
        %v1080 = vpack.c.bf16 %v1048, %v1048
        %v1081 = vpack.c.bf16 %v1049, %v1049
        %v1082 = vpack.c.bf16 %v1050, %v1050
        %v1083 = vpack.c.bf16 %v1051, %v1051
        %v1084 = vpack.c.bf16 %v1052, %v1052
        %v1085 = vpack.c.bf16 %v1053, %v1053
        %v1086 = vpack.c.bf16 %v1054, %v1054
        %v1087 = vpack.c.bf16 %v1055, %v1055
        %v1088 = vpack.c.bf16 %v1056, %v1056
        %v1089 = vpack.c.bf16 %v1057, %v1057
        %v1090 = vpack.c.bf16 %v1058, %v1058
        %v1091 = vpack.c.bf16 %v1059, %v1059
        %v1092 = vpack.c.bf16 %v1060, %v1060
        %v1093 = vpack.c.bf16 %v1061, %v1061
        %v1094 = vpack.c.bf16 %v1062, %v1062
        %v1095 = vpack.c.bf16 %v1063, %v1063
        %v1096 = vpack.c.bf16 %v1064, %v1064
        %v1097 = vpack.c.bf16 %v1065, %v1065
        %v1098 = vpack.c.bf16 %v1066, %v1066
        %v1099 = vpack.c.bf16 %v1067, %v1067
        %v1100 = vpack.c.bf16 %v1068, %v1068
        %v1101 = vpack.c.bf16 %v1069, %v1069
        %v1102 = vpack.c.bf16 %v1070, %v1070
        %v1103 = vpack.c.bf16 %v1071, %v1071
        %v1104 = vpack.c.bf16 %v1072, %v1072
        %v1105 = vpack.c.bf16 %v1073, %v1073
        %v1106 = vpack.c.bf16 %v1074, %v1074
        %v1107 = vpack.c.bf16 %v1075, %v1075
        %v1108 = vpack.c.bf16 %v1076, %v1076
        %1109 = vst [vmem:[%s306] sm:$0xf] %v1077
        %1110 = vst [vmem:[%s306 + $0x4] sm:$0xf] %v1078
        %1111 = vst [vmem:[%s306 + $0x8] sm:$0xf] %v1079
        %1112 = vst [vmem:[%s306 + $0xc] sm:$0xf] %v1080
        %1113 = vst [vmem:[%s306 + $0x10] sm:$0xf] %v1081
        %1114 = vst [vmem:[%s306 + $0x14] sm:$0xf] %v1082
        %1115 = vst [vmem:[%s306 + $0x18] sm:$0xf] %v1083
        %1116 = vst [vmem:[%s306 + $0x1c] sm:$0xf] %v1084
        %1117 = vst [vmem:[%s306 + $0x20] sm:$0xf] %v1085
        %1118 = vst [vmem:[%s306 + $0x24] sm:$0xf] %v1086
        %1119 = vst [vmem:[%s306 + $0x28] sm:$0xf] %v1087
        %1120 = vst [vmem:[%s306 + $0x2c] sm:$0xf] %v1088
        %1121 = vst [vmem:[%s306 + $0x30] sm:$0xf] %v1089
        %1122 = vst [vmem:[%s306 + $0x34] sm:$0xf] %v1090
        %1123 = vst [vmem:[%s306 + $0x38] sm:$0xf] %v1091
        %1124 = vst [vmem:[%s306 + $0x3c] sm:$0xf] %v1092
        %1125 = vst [vmem:[%s306 + $0x40] sm:$0xf] %v1093
        %1126 = vst [vmem:[%s306 + $0x44] sm:$0xf] %v1094
        %1127 = vst [vmem:[%s306 + $0x48] sm:$0xf] %v1095
        %1128 = vst [vmem:[%s306 + $0x4c] sm:$0xf] %v1096
        %1129 = vst [vmem:[%s306 + $0x50] sm:$0xf] %v1097
        %1130 = vst [vmem:[%s306 + $0x54] sm:$0xf] %v1098
        %1131 = vst [vmem:[%s306 + $0x58] sm:$0xf] %v1099
        %1132 = vst [vmem:[%s306 + $0x5c] sm:$0xf] %v1100
        %1133 = vst [vmem:[%s306 + $0x60] sm:$0xf] %v1101
        %1134 = vst [vmem:[%s306 + $0x64] sm:$0xf] %v1102
        %1135 = vst [vmem:[%s306 + $0x68] sm:$0xf] %v1103
        %1136 = vst [vmem:[%s306 + $0x6c] sm:$0xf] %v1104
        %1137 = vst [vmem:[%s306 + $0x70] sm:$0xf] %v1105
        %1138 = vst [vmem:[%s306 + $0x74] sm:$0xf] %v1106
        %1139 = vst [vmem:[%s306 + $0x78] sm:$0xf] %v1107
        %1140 = vst [vmem:[%s306 + $0x7c] sm:$0xf] %v1108
      $region44: #{matmul_scale_bias.1} parent=35 // pred_fallthru
        _
      %s1141 = smul.u32 32, %s20
      %p1142 = scmp.lt.s32.totalorder %s1141, 63
      %s1143 = scalar_select %p1142, %s1141, 63
      %p1144 = scmp.lt.s32.totalorder %s21, 0
      %s1145 = scalar_select %p1144, %s21, 0
      %s1146 = sadd.s32 %s1145, %s1143
      %s1147 = smul.addr %s1146, 4
      %s1148 = scalar_lea.vmem %s4, %s1147
      // Predicated region
      $region45: #{matmul_scale_bias.1} parent=35 // pred_check
        %p1149 = pneg %p162
      $region46: #{matmul_scale_bias.1} parent=35 // pred_check_branch
        %1151 = sbr.rel (%p1149) target = $region48
      $region47: #{matmul_scale_bias.1} parent=35 // pred_region
        %s1152 = smul.u32 32, %s20
      $region48: #{matmul_scale_bias.1} parent=35 // pred_fallthru
        _
    $region36: #{matmul_scale_bias.1} parent=5 // pred_fallthru
      _
    %p1153 = scmp.le.s32.totalorder 2, %s10
    // Predicated region
    $region49: #{matmul_scale_bias.1} parent=5 // pred_check
      %p1154 = pneg %p1153
    $region50: #{matmul_scale_bias.1} parent=5 // pred_check_branch
      %1156 = sbr.rel (%p1154) target = $region52
    $region51: #{matmul_scale_bias.1} parent=5 // pred_region
      %s1157 = ssub.s32 %s10, 2
      // Predicated region
      $region53: #{matmul_scale_bias.1} parent=51 // pred_check
        %p1158 = pneg %p168
      $region54: #{matmul_scale_bias.1} parent=51 // pred_check_branch
        %1160 = sbr.rel (%p1158) target = $region56
      $region55: #{matmul_scale_bias.1} parent=51 // pred_region
        %s1161 = smul.u32 32, %s23
        %p1162 = scmp.lt.s32.totalorder %s1161, 63
        %s1163 = scalar_select %p1162, %s1161, 63
        %p1164 = scmp.lt.s32.totalorder %s24, 0
        %s1165 = scalar_select %p1164, %s24, 0
        %s1166 = sadd.s32 %s1165, %s1163
        %s1167 = smul.addr %s1166, 4
        %s1168 = scalar_lea.vmem %s4, %s1167
      $region56: #{matmul_scale_bias.1} parent=51 // pred_fallthru
        _
    $region52: #{matmul_scale_bias.1} parent=5 // pred_fallthru
      _
  $region6: #{matmul_scale_bias.1} parent=0 // loop_footer
    %s14 = sadd.s32 1, %s10
  $region7: #{matmul_scale_bias.1} parent=0 // loop_footer_branch
    %9 = sbr.rel target = $region3
  $region8: #{matmul_scale_bias.1} parent=0 // loop_exit
    _

</llo_original>
